<compile_context>
chip_gen: v7x
topology: tpu7x:2x2x1
jax: 0.10.0
libtpu: 0.0.40
codegen_flags: <defaults>
</compile_context>

<pallas_src>
import jax
import jax.numpy as jnp
from jax.experimental import pallas as pl
from jax.experimental.pallas import tpu as pltpu


def _flatsim_v2_kernel(x_ref, y_ref, w_ref, b_ref, o_ref):
    # x_ref: (Bt, T, H)  VMEM, input dtype
    # y_ref: (Bt, 1, H)  VMEM, input dtype
    # w_ref: (4, H)      VMEM, input dtype, rows = [w_x, w_y, w_xy, w_absdiff]
    # b_ref: (1,)        SMEM, f32 bias scalar
    # o_ref: (Bt, T)     VMEM, output dtype (lane-dense: T on the lane axis)
    x = x_ref[...]                                   # (Bt, T, H)
    y = y_ref[...]                                   # (Bt, 1, H)
    w = w_ref[...]                                   # (4, H)
    w1, w2, w3, w4 = w[0:1], w[1:2], w[2:3], w[3:4]  # each (1, H)
    b = b_ref[0]                                     # f32 scalar

    # Fold x.w1 and (x*y).w3 into a single multiply: x . (w1 + w3*y).
    v = w1 + w3 * y                                                  # (Bt, 1, H)
    s = jnp.sum(x * v, axis=-1, dtype=jnp.float32)                   # (Bt, T)
    s = s + jnp.sum(jnp.abs(x - y) * w4, axis=-1, dtype=jnp.float32)  # (Bt, T)
    s = s + jnp.sum(y * w2, axis=-1, dtype=jnp.float32)              # + (Bt, 1)
    s = s + b
    o_ref[...] = s.astype(o_ref.dtype)


def _vmem_params():
    """(x-tile byte target, scoped vmem limit) derived from the chip's VMEM."""
    try:
        info = pltpu.get_tpu_info()
        cap = getattr(info, "vmem_capacity_bytes", 64 << 20)
    except Exception:  # pragma: no cover - conservative fallback off-TPU
        cap = 64 << 20
    if cap >= (128 << 20):          # v5e / v6e: 128 MiB VMEM
        return 16 << 20, 64 << 20
    return 10 << 20, 48 << 20        # v7x: 64 MiB per TC


def _pick_block_b(B, T, H, itemsize, target_bytes, min_steps=2):
    """Batch-block size: near target_bytes of x per step, sublane-aligned blocks."""
    per_b = max(1, T * H * itemsize)
    bt = max(1, target_bytes // per_b)
    bt = min(bt, B)
    if B <= 8:
        # Block must equal the full batch extent to keep the (Bt, T) output legal.
        return B
    bt = max(8, (bt // 8) * 8)                  # multiple of 8 (sublane-aligned)
    bt = min(bt, (B // 8) * 8)
    # v7x has 2 TensorCores: give the 'parallel' axis at least min_steps steps.
    if B >= 16 and pl.cdiv(B, bt) < min_steps:
        bt = max(8, ((B // min_steps) // 8) * 8)
    return bt


def flat_similarity(x, y, x_mask, weight, bias, *, block_b=None):
    """FlatSimV2 scores.

    x: (B, T, H) float; y: (B, H) float; x_mask: (B, T) bool (True = masked);
    weight: (1, 4*H)  (nn.Linear(4H, 1).weight); bias: (1,).
    Returns scores of shape (B, T) with -inf at masked positions.
    """
    B, T, H = x.shape
    assert y.shape == (B, H)
    assert weight.shape == (1, 4 * H)

    tile_target, vmem_limit = _vmem_params()
    if block_b is None:
        block_b = _pick_block_b(B, T, H, jnp.dtype(x.dtype).itemsize, tile_target)
    Bt = block_b
    grid = (pl.cdiv(B, Bt),)

    # Layout plumbing (free in XLA): leading-dim batch blocks everywhere.
    y3 = y.reshape(B, 1, H)
    # Elementwise math runs in the input dtype (packed bf16 VALU on v6e/v7x);
    # accumulation happens in f32 inside the kernel.
    w4h = weight.reshape(4, H).astype(x.dtype)   # rows: [w_x, w_y, w_xy, w_absdiff]
    b1 = bias.astype(jnp.float32).reshape(1)

    scores = pl.pallas_call(
        _flatsim_v2_kernel,
        out_shape=jax.ShapeDtypeStruct((B, T), x.dtype),
        grid=grid,
        in_specs=[
            pl.BlockSpec((Bt, T, H), lambda i: (i, 0, 0)),       # x batch block
            pl.BlockSpec((Bt, 1, H), lambda i: (i, 0, 0)),       # y batch block
            pl.BlockSpec((4, H), lambda i: (0, 0)),              # weights (resident)
            pl.BlockSpec(memory_space=pltpu.MemorySpace.SMEM),   # bias scalar
        ],
        out_specs=pl.BlockSpec((Bt, T), lambda i: (i, 0)),       # lane-dense output
        compiler_params=pltpu.CompilerParams(
            dimension_semantics=("parallel",),
            vmem_limit_bytes=vmem_limit,
        ),
    )(x, y3, w4h, b1)

    # Mask in the wrapper on the true (B, T) extent (also correct for cdiv grids
    # with a partial last batch block).
    return jnp.where(x_mask, -jnp.inf, scores)


def flatsim_v2_reference(x, y, x_mask, weight, bias):
    """Pure-JAX reference mirroring the PyTorch FlatSimV2 forward."""
    yb = jnp.broadcast_to(y[:, None, :], x.shape)
    flat = jnp.concatenate([x, yb, x * yb, jnp.abs(x - yb)], axis=-1)  # (B, T, 4H)
    scores = jnp.einsum("bth,h->bt", flat, weight[0]) + bias[0]
    return jnp.where(x_mask, -jnp.inf, scores)


if __name__ == "__main__":
    B, T, H = 2, 8, 32        # x1_dim = x2_dim = 32  -> Linear(4*32 -> 1)
    key = jax.random.PRNGKey(0)
    kx, ky, kw, kb = jax.random.split(key, 4)

    x = jax.random.normal(kx, (B, T, H), dtype=jnp.float32)
    y = jax.random.normal(ky, (B, H), dtype=jnp.float32)
    weight = jax.random.normal(kw, (1, 4 * H), dtype=jnp.float32) * 0.1
    bias = jax.random.normal(kb, (1,), dtype=jnp.float32) * 0.1
    # True = masked-out position (tail of each sequence)
    x_mask = jnp.arange(T)[None, :] >= jnp.array([[6], [5]])   # (B, T) bool

    out = flat_similarity(x, y, x_mask, weight, bias)
    out = jax.block_until_ready(out)

    ref = flatsim_v2_reference(x, y, x_mask, weight, bias)
    assert out.shape == (B, T)
    # -inf positions must match exactly; finite positions must be close.
    assert bool(jnp.array_equal(jnp.isneginf(out), jnp.isneginf(ref)))
    finite = jnp.isfinite(ref)
    a = jnp.where(finite, out, 0.0)
    b = jnp.where(finite, ref, 0.0)
    assert bool(jnp.allclose(a, b, atol=1e-5, rtol=1e-5)), (
        f"max err {jnp.max(jnp.abs(a - b))}")
    print("KERNEL_OK")
</pallas_src>

<mosaic_0001>
module attributes {stable_mosaic.version = 11 : i64} {
  func.func @_flatsim_v2_kernel(%arg0: i32, %arg1: memref<2x8x32xf32, #tpu.memory_space<vmem>>, %arg2: memref<2x1x32xf32, #tpu.memory_space<vmem>>, %arg3: memref<4x32xf32, #tpu.memory_space<vmem>>, %arg4: memref<1xf32, #tpu.memory_space<smem>>, %arg5: memref<2x8xf32, #tpu.memory_space<vmem>>) attributes {dimension_semantics = [#tpu.dimension_semantics<parallel>], iteration_bounds = array<i64: 1>, scalar_prefetch = 0 : i64, scratch_operands = 0 : i64, tpu.core_type = #tpu.core_type<tc>, window_params = [{transform_indices = @transform_0, window_bounds = array<i64: 2, 8, 32>}, {transform_indices = @transform_1, window_bounds = array<i64: 2, 1, 32>}, {pipeline_mode = #tpu.pipeline_mode<synchronous>, transform_indices = @transform_2, window_bounds = array<i64: 4, 32>}, {transform_indices = @transform_3, window_bounds = array<i64: 1>}, {transform_indices = @transform_4, window_bounds = array<i64: 2, 8>}]} {
    %c0 = arith.constant 0 : index
    %c0_0 = arith.constant 0 : index
    %c0_1 = arith.constant 0 : index
    %0 = vector.load %arg1[%c0, %c0_0, %c0_1] : memref<2x8x32xf32, #tpu.memory_space<vmem>>, vector<2x8x32xf32>
    %c0_2 = arith.constant 0 : index
    %c0_3 = arith.constant 0 : index
    %c0_4 = arith.constant 0 : index
    %1 = vector.load %arg2[%c0_2, %c0_3, %c0_4] : memref<2x1x32xf32, #tpu.memory_space<vmem>>, vector<2x1x32xf32>
    %c0_5 = arith.constant 0 : index
    %c0_6 = arith.constant 0 : index
    %2 = vector.load %arg3[%c0_5, %c0_6] : memref<4x32xf32, #tpu.memory_space<vmem>>, vector<4x32xf32>
    %3 = vector.extract_strided_slice %2 {offsets = [0, 0], sizes = [1, 32], strides = [1, 1]} : vector<4x32xf32> to vector<1x32xf32>
    %4 = vector.extract_strided_slice %2 {offsets = [1, 0], sizes = [1, 32], strides = [1, 1]} : vector<4x32xf32> to vector<1x32xf32>
    %5 = vector.extract_strided_slice %2 {offsets = [2, 0], sizes = [1, 32], strides = [1, 1]} : vector<4x32xf32> to vector<1x32xf32>
    %6 = vector.extract_strided_slice %2 {offsets = [3, 0], sizes = [1, 32], strides = [1, 1]} : vector<4x32xf32> to vector<1x32xf32>
    %c0_7 = arith.constant 0 : index
    %7 = memref.load %arg4[%c0_7] : memref<1xf32, #tpu.memory_space<smem>>
    %8 = vector.shape_cast %5 : vector<1x32xf32> to vector<1x1x32xf32>
    %9 = vector.broadcast %8 : vector<1x1x32xf32> to vector<2x1x32xf32>
    %10 = arith.mulf %9, %1 : vector<2x1x32xf32>
    %11 = vector.shape_cast %3 : vector<1x32xf32> to vector<1x1x32xf32>
    %12 = vector.broadcast %11 : vector<1x1x32xf32> to vector<2x1x32xf32>
    %13 = arith.addf %12, %10 : vector<2x1x32xf32>
    %14 = vector.broadcast %13 : vector<2x1x32xf32> to vector<2x8x32xf32>
    %15 = arith.mulf %0, %14 : vector<2x8x32xf32>
    %cst = arith.constant dense<0.000000e+00> : vector<2x8xf32>
    %16 = vector.multi_reduction <add>, %15, %cst [2] : vector<2x8x32xf32> to vector<2x8xf32>
    %17 = vector.broadcast %1 : vector<2x1x32xf32> to vector<2x8x32xf32>
    %18 = arith.subf %0, %17 : vector<2x8x32xf32>
    %19 = math.absf %18 : vector<2x8x32xf32>
    %20 = vector.shape_cast %6 : vector<1x32xf32> to vector<1x1x32xf32>
    %21 = vector.broadcast %20 : vector<1x1x32xf32> to vector<2x8x32xf32>
    %22 = arith.mulf %19, %21 : vector<2x8x32xf32>
    %cst_8 = arith.constant dense<0.000000e+00> : vector<2x8xf32>
    %23 = vector.multi_reduction <add>, %22, %cst_8 [2] : vector<2x8x32xf32> to vector<2x8xf32>
    %24 = arith.addf %16, %23 : vector<2x8xf32>
    %25 = vector.shape_cast %4 : vector<1x32xf32> to vector<1x1x32xf32>
    %26 = vector.broadcast %25 : vector<1x1x32xf32> to vector<2x1x32xf32>
    %27 = arith.mulf %1, %26 : vector<2x1x32xf32>
    %cst_9 = arith.constant dense<0.000000e+00> : vector<2x1xf32>
    %28 = vector.multi_reduction <add>, %27, %cst_9 [2] : vector<2x1x32xf32> to vector<2x1xf32>
    %29 = vector.broadcast %28 : vector<2x1xf32> to vector<2x8xf32>
    %30 = arith.addf %24, %29 : vector<2x8xf32>
    %31 = vector.broadcast %7 : f32 to vector<2x8xf32>
    %32 = arith.addf %30, %31 : vector<2x8xf32>
    %c0_10 = arith.constant 0 : index
    %c0_11 = arith.constant 0 : index
    %33 = vector.load %arg5[%c0_10, %c0_11] : memref<2x8xf32, #tpu.memory_space<vmem>>, vector<2x8xf32>
    tpu.vector_store %arg5[%c0_10, %c0_11], %32 {strides = array<i32>} : memref<2x8xf32, #tpu.memory_space<vmem>>, vector<2x8xf32>,
    return
  }
  func.func @transform_0(%arg0: i32) -> (i32, i32, i32) {
    %c0_i32 = arith.constant 0 : i32
    %c0_i32_0 = arith.constant 0 : i32
    %c0_i32_1 = arith.constant 0 : i32
    return %arg0, %c0_i32, %c0_i32_0 : i32, i32, i32
  }
  func.func @transform_1(%arg0: i32) -> (i32, i32, i32) {
    %c0_i32 = arith.constant 0 : i32
    %c0_i32_0 = arith.constant 0 : i32
    %c0_i32_1 = arith.constant 0 : i32
    return %arg0, %c0_i32, %c0_i32_0 : i32, i32, i32
  }
  func.func @transform_2(%arg0: i32) -> (i32, i32) {
    %c0_i32 = arith.constant 0 : i32
    %c0_i32_0 = arith.constant 0 : i32
    %c0_i32_1 = arith.constant 0 : i32
    return %c0_i32, %c0_i32_0 : i32, i32
  }
  func.func @transform_3(%arg0: i32) -> i32 {
    %c0_i32 = arith.constant 0 : i32
    %c0_i32_0 = arith.constant 0 : i32
    return %c0_i32 : i32
  }
  func.func @transform_4(%arg0: i32) -> (i32, i32) {
    %c0_i32 = arith.constant 0 : i32
    %c0_i32_0 = arith.constant 0 : i32
    return %arg0, %c0_i32 : i32, i32
  }
}

</mosaic_0001>

<llo_original>
// kernel: tpu_custom_call.1
$region0: #{tpu_custom_call.1}
  #allocation0 [shape = 'u32[]', space=smem, size = 0x4, offset = 0x4, fixed_abs, tag = 'smem constant byte address 0x4 - core index']
  #allocation1 [shape = 'u32[144,128]{1,0:T(1,128)}', space=vmem, size = 0x12000, scoped, tag = 'internal scratch']
  #allocation2 [shape = 'f32[1]{0:T(128)S(6)}', space=smem, size = 0x200, scoped, tag = 'scoped memory for tpu_custom_call.1']
  %s0 = inlined_call_operand.hbm [shape: f32[2,8,32], index: 0, kind: input, shape index: {}]
  %s1 = inlined_call_operand.vmem [shape: f32[2,1,32], index: 1, kind: input, shape index: {}]
  %s2 = inlined_call_operand.vmem [shape: f32[4,32], index: 2, kind: input, shape index: {}]
  %s3 = inlined_call_operand.<no memory space> [shape: f32[1], index: 3, kind: input, shape index: {}]
  %s4 = inlined_call_operand.hbm [shape: f32[2,8], index: 4, kind: output, shape index: {}]
  %s5 = sld [smem:[#allocation0]]
  $region30: #{tpu_custom_call.1} parent=0
    _
  %s7 = ssub.s32 1, %s5
  %s8 = scalar_select 0, %s7, %s5
  %9 = sst [smem:[#allocation2]] %s3
  $region1: #{tpu_custom_call.1} parent=0
    #allocation3 [shape = 'u8[8192]{0}', space=vmem, size = 0x2000, scoped, tag = 'input window, operand 0, single buffered']
    #allocation4 [shape = 's32[1]{0}', space=sflag, size = 0x4, scoped, tag = 'scoped memory for tpu_custom_call.1']
    #allocation5 [shape = 's32[1]{0}', space=sflag, size = 0x4, scoped, tag = 'scoped memory for tpu_custom_call.1']
    #allocation6 [shape = 'u8[1024]{0}', space=vmem, size = 0x400, scoped, tag = 'output window, operand 0, single buffered']
    %10 = vsyncpa [#allocation4], 0
    %11 = vsyncpa [#allocation5], 0
    // Predicated region
    $region2: #{tpu_custom_call.1} parent=1 // pred_check
      _
    $region3: #{tpu_custom_call.1} parent=1 // pred_check_branch
      %13 = sbr.rel (0) target = $region5
    $region4: #{tpu_custom_call.1} parent=1 // pred_region
      %s15 = ssub.s32 256, 256
      %16 = vsyncadd [#allocation4], %s15
      %s17 = sshll.u32 [#allocation3], 4
      %s18 = int_to_ptr.vmem [resolvable:$true] %s17
      %23 = dma.hbm_to_vmem [thread:$0]  %s0, 256, %s18, [#allocation4], 128, 128, 8
    $region5: #{tpu_custom_call.1} parent=1 // pred_fallthru
      _
    // Predicated region
    $region6: #{tpu_custom_call.1} parent=1 // pred_check
      _
    $region7: #{tpu_custom_call.1} parent=1 // pred_check_branch
      %25 = sbr.rel (0) target = $region9
    $region8: #{tpu_custom_call.1} parent=1 // pred_region
      _
    $region9: #{tpu_custom_call.1} parent=1 // pred_fallthru
      _
    // Predicated region
    $region10: #{tpu_custom_call.1} parent=1 // pred_check
      _
    $region11: #{tpu_custom_call.1} parent=1 // pred_check_branch
      %27 = sbr.rel (0) target = $region13
    $region12: #{tpu_custom_call.1} parent=1 // pred_region
      _
    $region13: #{tpu_custom_call.1} parent=1 // pred_fallthru
      _
    // Predicated region
    $region14: #{tpu_custom_call.1} parent=1 // pred_check
      _
    $region15: #{tpu_custom_call.1} parent=1 // pred_check_branch
      %29 = sbr.rel (0) target = $region17
    $region16: #{tpu_custom_call.1} parent=1 // pred_region
      _
    $region17: #{tpu_custom_call.1} parent=1 // pred_fallthru
      _
    // Predicated region
    $region18: #{tpu_custom_call.1} parent=1 // pred_check
      _
    $region19: #{tpu_custom_call.1} parent=1 // pred_check_branch
      %31 = sbr.rel (0) target = $region21
    $region20: #{tpu_custom_call.1} parent=1 // pred_region
      %32 = dma.done [#allocation4], 256
    $region21: #{tpu_custom_call.1} parent=1 // pred_fallthru
      _
    %v33 = vld [vmem:[#allocation3] sm:$0xff]
    %v34 = vld [vmem:[#allocation3 + $0x8] sm:$0xff]
    %v35 = vld [vmem:[%s1] sm:$0x1]
    %v36 = vld [vmem:[%s1 + $0x1] sm:$0x1]
    %v37 = vld [vmem:[%s2] sm:$0xf]
    %s38 = sld [smem:[#allocation2]]
    %v41 = vlaneseq
    %v42 = vshrl.u32 %v41, 7
    %v43 = vsub.s32 0, %v42
    %v44 = vrot.slane %v35, %v43
    %v45 = vlaneseq
    %v46 = vshrl.u32 %v45, 7
    %v47 = vsub.s32 0, %v46
    %v48 = vrot.slane %v36, %v47
    %v51 = vmul.f32 %v37, %v44
    %v52 = vmul.f32 %v37, %v48
    %v55 = vrot.slane %v51, 2
    %v56 = vrot.slane %v52, 2
    %v59 = vadd.f32 %v37, %v55
    %v60 = vadd.f32 %v37, %v56
    %v61 = vlaneseq
    %v62 = vshrl.u32 %v61, 7
    %v63 = vsub.s32 0, %v62
    %v64 = vrot.slane %v59, %v63
    %v65 = vlaneseq
    %v66 = vshrl.u32 %v65, 7
    %v67 = vsub.s32 0, %v66
    %v68 = vrot.slane %v60, %v67
    %v69 = vmul.f32 %v33, %v64
    %v70 = vmul.f32 %v34, %v68
    %vm71 = vcmask 261120
    %v72 = vsel %vm71, %v69, 0.0
    %73 = vadd.xlane.f32.xlu0 %v72
    %v74 = vpop.xlane.xlu0 %73
    %v75 = vsel %vm71, %v70, 0.0
    %76 = vadd.xlane.f32.xlu0 %v75
    %v77 = vpop.xlane.xlu0 %76
    %v78 = vsub.f32 %v33, %v44
    %v79 = vsub.f32 %v34, %v48
    %v80 = vand.u32 2147483647, %v78
    %v81 = vand.u32 2147483647, %v79
    %v82 = vlaneseq
    %v83 = vshrl.u32 %v82, 7
    %v84 = vsub.s32 3, %v83
    %v85 = vrot.slane %v37, %v84
    %v86 = vmul.f32 %v80, %v85
    %v87 = vmul.f32 %v81, %v85
    %v88 = vsel %vm71, %v86, 0.0
    %89 = vadd.xlane.f32.xlu0 %v88
    %v90 = vpop.xlane.xlu0 %89
    %v91 = vsel %vm71, %v87, 0.0
    %92 = vadd.xlane.f32.xlu0 %v91
    %v93 = vpop.xlane.xlu0 %92
    %v94 = vadd.f32 %v74, %v90
    %v95 = vadd.f32 %v77, %v93
    %v98 = vunpack.c.l.s4 1966171168
    %v99 = vunpack.c.0.s8 %v98
    %v100 = vlaneseq
    %v101 = vshrl.u32 %v100, 7
    %v102 = vsub.s32 %v99, %v101
    %v103 = vrot.slane %v37, %v102
    %v104 = vcombine.high %v103, %v103
    %v106 = vunpack.c.l.s4 1966171168
    %v107 = vunpack.c.0.s8 %v106
    %v108 = vlaneseq
    %v109 = vshrl.u32 %v108, 7
    %v110 = vsub.s32 %v107, %v109
    %v111 = vrot.slane %v104, %v110
    %v113 = vmul.f32 %v35, %v111
    %v114 = vmul.f32 %v36, %v111
    %vm115 = vcmask 253952
    %v116 = vsel %vm115, %v113, 0.0
    %117 = vadd.xlane.f32.xlu0 %v116
    %v118 = vpop.xlane.xlu0 %117
    %v119 = vsel %vm115, %v114, 0.0
    %120 = vadd.xlane.f32.xlu0 %v119
    %v121 = vpop.xlane.xlu0 %120
    %v122 = vlaneseq
    %v123 = vshrl.u32 %v122, 7
    %v124 = vsub.s32 0, %v123
    %v125 = vrot.slane %v118, %v124
    %v126 = vlaneseq
    %v127 = vshrl.u32 %v126, 7
    %v128 = vsub.s32 0, %v127
    %v129 = vrot.slane %v121, %v128
    %v130 = vadd.f32 %v94, %v125
    %v131 = vadd.f32 %v95, %v129
    %v132 = vstv %s38
    %v133 = vadd.f32 %v130, %v132
    %v134 = vadd.f32 %v131, %v132
    %v137 = vlaneseq
    %v138 = vand.u32 %v137, 127
    %v139 = vlaneseq
    %v140 = vshrl.u32 %v139, 7
    %v141 = vsub.s32 %v138, %v140
    %v142 = vrot.slane %v133, %v141
    %v143 = vlaneseq
    %v144 = vshrl.u32 %v143, 7
    %v145 = vsub.s32 %v138, %v144
    %v146 = vrot.slane %v134, %v145
    %vm147 = vcmask 1041409
    %v148 = vsel %vm147, %v146, %v142
    %vm150 = vcmask 58368
    %151 = vst.msk [vmem:[#allocation6] sm:$0x3] %vm150, %v148
    // Predicated region
    $region22: #{tpu_custom_call.1} parent=1 // pred_check
      _
    $region23: #{tpu_custom_call.1} parent=1 // pred_check_branch
      %153 = sbr.rel (0) target = $region25
    $region24: #{tpu_custom_call.1} parent=1 // pred_region
      %s155 = ssub.s32 32, 32
      %156 = vsyncadd [#allocation5], %s155
      %s158 = sshll.u32 [#allocation6], 4
      %s159 = int_to_ptr.vmem [resolvable:$true] %s158
      %161 = dma.vmem_to_hbm [thread:$0]  %s159, 32, %s4, [#allocation5]
    $region25: #{tpu_custom_call.1} parent=1 // pred_fallthru
      _
    // Predicated region
    $region26: #{tpu_custom_call.1} parent=1 // pred_check
      _
    $region27: #{tpu_custom_call.1} parent=1 // pred_check_branch
      %163 = sbr.rel (0) target = $region29
    $region28: #{tpu_custom_call.1} parent=1 // pred_region
      %164 = dma.done [#allocation5], 32
    $region29: #{tpu_custom_call.1} parent=1 // pred_fallthru
      _
    %165 = vsyncpa [#allocation4], 1
    %166 = vsyncpa [#allocation5], 1

</llo_original>
